<compile_context>
chip_gen: v6e
topology: v6e:2x2x1
jax: 0.10.0
libtpu: 0.0.40
codegen_flags: <defaults>
</compile_context>

<pallas_src>
import jax
import jax.numpy as jnp
from jax.experimental import pallas as pl
from jax.experimental.pallas import tpu as pltpu


LANE = 128


def _round_up(x, m):
    return (x + m - 1) // m * m


def xlayernet_kernel(x_ref, w1_ref, b1_ref, w2_ref, b2_ref, w3_ref, b3_ref,
                     o_ref):
    # Layer 1: relu(x @ W1 + b1) -- f32 matmul + f32 accumulate.
    h = jnp.dot(x_ref[...], w1_ref[...],
                preferred_element_type=jnp.float32) + b1_ref[...]
    h = jnp.maximum(h, 0.0)
    # Layer 2
    h = jnp.dot(h, w2_ref[...],
                preferred_element_type=jnp.float32) + b2_ref[...]
    h = jnp.maximum(h, 0.0)
    # Layer 3 (output logits, true d_out width -- no lane padding)
    h = jnp.dot(h, w3_ref[...],
                preferred_element_type=jnp.float32) + b3_ref[...]
    h = jnp.maximum(h, 0.0)
    # Numerically stable log_softmax along the feature axis (dim=1).
    m = jnp.max(h, axis=-1, keepdims=True)
    s = h - m
    lse = jnp.log(jnp.sum(jnp.exp(s), axis=-1, keepdims=True))
    o_ref[...] = (s - lse).astype(o_ref.dtype)


def prepare_params(params):
    """One-time parameter prep (hoisted out of the per-call path):
    transpose (out,in)->(in,out); zero-pad HIDDEN dims to 128 lanes (VMEM-only,
    no HBM cost, keeps intermediate matmuls lane-dense); the FINAL output dim
    stays at its true width d_out so the HBM output write carries no padding.
    Everything stays f32 (kernel is memory-bound; f32 compute is free)."""
    w1, b1, w2, b2, w3, b3 = params

    def prep(w, b, in_pad, pad_out):
        out_d, in_d = w.shape
        out_pad = _round_up(out_d, LANE) if pad_out else out_d
        wt = jnp.zeros((in_pad, out_pad), jnp.float32)
        wt = wt.at[:in_d, :out_d].set(w.T.astype(jnp.float32))
        bp = jnp.zeros((1, out_pad), jnp.float32)
        bp = bp.at[:, :out_d].set(b.astype(jnp.float32))
        return wt, bp

    d_in = w1.shape[1]
    w1t, b1r = prep(w1, b1, in_pad=d_in, pad_out=True)            # (D_in, 128)
    w2t, b2r = prep(w2, b2, in_pad=w1t.shape[1], pad_out=True)    # (128, 128)
    w3t, b3r = prep(w3, b3, in_pad=w2t.shape[1], pad_out=False)   # (128, D_out)
    return (w1t, b1r, w2t, b2r, w3t, b3r)


def xlayernet_forward(x, prepped, tile_n_cap=2048):
    """x: (N, D_in) f32; prepped: output of prepare_params."""
    w1t, b1r, w2t, b2r, w3t, b3r = prepped
    n, d_in = x.shape
    d_out = w3t.shape[1]

    # Tile choice: aim for >= 4 grid steps (v7x megacore keeps both TCs busy
    # with room to double-buffer), but cap the tile so double-buffered x/out
    # tiles + f32 intermediates stay far below v5e's 16 MiB scoped VMEM.
    tile_n = min(int(tile_n_cap), max(_round_up(pl.cdiv(n, 4), 8), 8))
    n_pad = _round_up(n, tile_n)
    # Only pad the batch when N isn't tile-aligned (demo shapes avoid this).
    xp = x if n_pad == n else jnp.pad(x, ((0, n_pad - n), (0, 0)))

    grid = (n_pad // tile_n,)
    resident = lambda arr: pl.BlockSpec(arr.shape, lambda i: (0, 0))

    out = pl.pallas_call(
        xlayernet_kernel,
        out_shape=jax.ShapeDtypeStruct((n_pad, d_out), jnp.float32),
        grid=grid,
        in_specs=[
            pl.BlockSpec((tile_n, d_in), lambda i: (i, 0)),   # x: tiled on batch
            resident(w1t), resident(b1r),                      # params: VMEM-resident
            resident(w2t), resident(b2r),
            resident(w3t), resident(b3r),
        ],
        out_specs=pl.BlockSpec((tile_n, d_out), lambda i: (i, 0)),
        compiler_params=pltpu.CompilerParams(
            dimension_semantics=("parallel",)),                # megacore on v7x
    )(xp, w1t, b1r, w2t, b2r, w3t, b3r)

    return out if n_pad == n else out[:n]


def init_params(key, d_in, hidden):
    """Deterministic synthetic init (PyTorch-like uniform fan-in scaling)."""
    dims = [d_in] + list(hidden)
    params = []
    for i in range(3):
        fan_in, fan_out = dims[i], dims[i + 1]
        key, kw, kb = jax.random.split(key, 3)
        bound = 1.0 / jnp.sqrt(fan_in)
        w = jax.random.uniform(kw, (fan_out, fan_in), jnp.float32, -bound, bound)
        b = jax.random.uniform(kb, (fan_out,), jnp.float32, -bound, bound)
        params += [w, b]
    return tuple(params)


def reference_forward(x, params):
    w1, b1, w2, b2, w3, b3 = params
    h = jax.nn.relu(x @ w1.T + b1)
    h = jax.nn.relu(h @ w2.T + b2)
    h = jax.nn.relu(h @ w3.T + b3)
    return jax.nn.log_softmax(h, axis=1)


if __name__ == "__main__":
    D_in = 32
    H = (64, 32, 16)   # H[0], H[1], H[2] (D_out folded into H, as in the module)
    N = 256            # -> tile_n = 64, grid of 4 batch tiles

    key = jax.random.PRNGKey(0)
    key, kx = jax.random.split(key)
    x = jax.random.normal(kx, (N, D_in), jnp.float32)
    params = init_params(key, D_in, H)
    prepped = prepare_params(params)   # transpose/pad done once, not per call

    fwd = jax.jit(xlayernet_forward)
    out = fwd(x, prepped)
    jax.block_until_ready(out)

    ref = reference_forward(x, params)
    assert out.shape == (N, H[2])
    # f32 compute path on both sides -> tight tolerance.
    assert jnp.allclose(out, ref, atol=2e-3, rtol=2e-3), float(
        jnp.max(jnp.abs(out - ref)))
    print("KERNEL_OK")
</pallas_src>

<mosaic_0001>
module attributes {stable_mosaic.version = 11 : i64} {
  func.func @xlayernet_kernel(%arg0: i32, %arg1: memref<64x32xf32, #tpu.memory_space<vmem>>, %arg2: memref<32x128xf32, #tpu.memory_space<vmem>>, %arg3: memref<1x128xf32, #tpu.memory_space<vmem>>, %arg4: memref<128x128xf32, #tpu.memory_space<vmem>>, %arg5: memref<1x128xf32, #tpu.memory_space<vmem>>, %arg6: memref<128x16xf32, #tpu.memory_space<vmem>>, %arg7: memref<1x16xf32, #tpu.memory_space<vmem>>, %arg8: memref<64x16xf32, #tpu.memory_space<vmem>>) attributes {dimension_semantics = [#tpu.dimension_semantics<parallel>], iteration_bounds = array<i64: 4>, scalar_prefetch = 0 : i64, scratch_operands = 0 : i64, tpu.core_type = #tpu.core_type<tc>, window_params = [{transform_indices = @transform_0, window_bounds = array<i64: 64, 32>}, {pipeline_mode = #tpu.pipeline_mode<synchronous>, transform_indices = @transform_1, window_bounds = array<i64: 32, 128>}, {pipeline_mode = #tpu.pipeline_mode<synchronous>, transform_indices = @transform_2, window_bounds = array<i64: 1, 128>}, {pipeline_mode = #tpu.pipeline_mode<synchronous>, transform_indices = @transform_3, window_bounds = array<i64: 128, 128>}, {pipeline_mode = #tpu.pipeline_mode<synchronous>, transform_indices = @transform_4, window_bounds = array<i64: 1, 128>}, {pipeline_mode = #tpu.pipeline_mode<synchronous>, transform_indices = @transform_5, window_bounds = array<i64: 128, 16>}, {pipeline_mode = #tpu.pipeline_mode<synchronous>, transform_indices = @transform_6, window_bounds = array<i64: 1, 16>}, {transform_indices = @transform_7, window_bounds = array<i64: 64, 16>}]} {
    %c0 = arith.constant 0 : index
    %c0_0 = arith.constant 0 : index
    %0 = vector.load %arg1[%c0, %c0_0] : memref<64x32xf32, #tpu.memory_space<vmem>>, vector<64x32xf32>
    %c0_1 = arith.constant 0 : index
    %c0_2 = arith.constant 0 : index
    %1 = vector.load %arg2[%c0_1, %c0_2] : memref<32x128xf32, #tpu.memory_space<vmem>>, vector<32x128xf32>
    %cst = arith.constant dense<0.000000e+00> : vector<64x128xf32>
    %2 = tpu.matmul %0, %1, %cst {dimension_numbers = #tpu.dot_dimension_numbers<[1], [0], [0], [1], [0, 0, 1, 1], [], []>} : vector<64x32xf32>, vector<32x128xf32>, vector<64x128xf32> -> vector<64x128xf32>
    %c0_3 = arith.constant 0 : index
    %c0_4 = arith.constant 0 : index
    %3 = vector.load %arg3[%c0_3, %c0_4] : memref<1x128xf32, #tpu.memory_space<vmem>>, vector<1x128xf32>
    %4 = vector.broadcast %3 : vector<1x128xf32> to vector<64x128xf32>
    %5 = arith.addf %2, %4 : vector<64x128xf32>
    %cst_5 = arith.constant 0.000000e+00 : f32
    %6 = vector.broadcast %cst_5 : f32 to vector<64x128xf32>
    %7 = arith.maximumf %5, %6 : vector<64x128xf32>
    %c0_6 = arith.constant 0 : index
    %c0_7 = arith.constant 0 : index
    %8 = vector.load %arg4[%c0_6, %c0_7] : memref<128x128xf32, #tpu.memory_space<vmem>>, vector<128x128xf32>
    %cst_8 = arith.constant dense<0.000000e+00> : vector<64x128xf32>
    %9 = tpu.matmul %7, %8, %cst_8 {dimension_numbers = #tpu.dot_dimension_numbers<[1], [0], [0], [1], [0, 0, 1, 1], [], []>} : vector<64x128xf32>, vector<128x128xf32>, vector<64x128xf32> -> vector<64x128xf32>
    %c0_9 = arith.constant 0 : index
    %c0_10 = arith.constant 0 : index
    %10 = vector.load %arg5[%c0_9, %c0_10] : memref<1x128xf32, #tpu.memory_space<vmem>>, vector<1x128xf32>
    %11 = vector.broadcast %10 : vector<1x128xf32> to vector<64x128xf32>
    %12 = arith.addf %9, %11 : vector<64x128xf32>
    %cst_11 = arith.constant 0.000000e+00 : f32
    %13 = vector.broadcast %cst_11 : f32 to vector<64x128xf32>
    %14 = arith.maximumf %12, %13 : vector<64x128xf32>
    %c0_12 = arith.constant 0 : index
    %c0_13 = arith.constant 0 : index
    %15 = vector.load %arg6[%c0_12, %c0_13] : memref<128x16xf32, #tpu.memory_space<vmem>>, vector<128x16xf32>
    %cst_14 = arith.constant dense<0.000000e+00> : vector<64x16xf32>
    %16 = tpu.matmul %14, %15, %cst_14 {dimension_numbers = #tpu.dot_dimension_numbers<[1], [0], [0], [1], [0, 0, 1, 1], [], []>} : vector<64x128xf32>, vector<128x16xf32>, vector<64x16xf32> -> vector<64x16xf32>
    %c0_15 = arith.constant 0 : index
    %c0_16 = arith.constant 0 : index
    %17 = vector.load %arg7[%c0_15, %c0_16] : memref<1x16xf32, #tpu.memory_space<vmem>>, vector<1x16xf32>
    %18 = vector.broadcast %17 : vector<1x16xf32> to vector<64x16xf32>
    %19 = arith.addf %16, %18 : vector<64x16xf32>
    %cst_17 = arith.constant 0.000000e+00 : f32
    %20 = vector.broadcast %cst_17 : f32 to vector<64x16xf32>
    %21 = arith.maximumf %19, %20 : vector<64x16xf32>
    %cst_18 = arith.constant dense<0xFF800000> : vector<64xf32>
    %22 = vector.multi_reduction <maximumf>, %21, %cst_18 [1] : vector<64x16xf32> to vector<64xf32>
    %23 = vector.shape_cast %22 : vector<64xf32> to vector<64x1xf32>
    %24 = vector.broadcast %23 : vector<64x1xf32> to vector<64x16xf32>
    %25 = arith.subf %21, %24 : vector<64x16xf32>
    %26 = math.exp %25 : vector<64x16xf32>
    %cst_19 = arith.constant dense<0.000000e+00> : vector<64xf32>
    %27 = vector.multi_reduction <add>, %26, %cst_19 [1] : vector<64x16xf32> to vector<64xf32>
    %28 = vector.shape_cast %27 : vector<64xf32> to vector<64x1xf32>
    %29 = math.log %28 : vector<64x1xf32>
    %30 = vector.broadcast %29 : vector<64x1xf32> to vector<64x16xf32>
    %31 = arith.subf %25, %30 : vector<64x16xf32>
    %c0_20 = arith.constant 0 : index
    %c0_21 = arith.constant 0 : index
    %32 = vector.load %arg8[%c0_20, %c0_21] : memref<64x16xf32, #tpu.memory_space<vmem>>, vector<64x16xf32>
    tpu.vector_store %arg8[%c0_20, %c0_21], %31 {strides = array<i32>} : memref<64x16xf32, #tpu.memory_space<vmem>>, vector<64x16xf32>,
    return
  }
  func.func @transform_0(%arg0: i32) -> (i32, i32) {
    %c0_i32 = arith.constant 0 : i32
    %c0_i32_0 = arith.constant 0 : i32
    return %arg0, %c0_i32 : i32, i32
  }
  func.func @transform_1(%arg0: i32) -> (i32, i32) {
    %c0_i32 = arith.constant 0 : i32
    %c0_i32_0 = arith.constant 0 : i32
    %c0_i32_1 = arith.constant 0 : i32
    return %c0_i32, %c0_i32_0 : i32, i32
  }
  func.func @transform_2(%arg0: i32) -> (i32, i32) {
    %c0_i32 = arith.constant 0 : i32
    %c0_i32_0 = arith.constant 0 : i32
    %c0_i32_1 = arith.constant 0 : i32
    return %c0_i32, %c0_i32_0 : i32, i32
  }
  func.func @transform_3(%arg0: i32) -> (i32, i32) {
    %c0_i32 = arith.constant 0 : i32
    %c0_i32_0 = arith.constant 0 : i32
    %c0_i32_1 = arith.constant 0 : i32
    return %c0_i32, %c0_i32_0 : i32, i32
  }
  func.func @transform_4(%arg0: i32) -> (i32, i32) {
    %c0_i32 = arith.constant 0 : i32
    %c0_i32_0 = arith.constant 0 : i32
    %c0_i32_1 = arith.constant 0 : i32
    return %c0_i32, %c0_i32_0 : i32, i32
  }
  func.func @transform_5(%arg0: i32) -> (i32, i32) {
    %c0_i32 = arith.constant 0 : i32
    %c0_i32_0 = arith.constant 0 : i32
    %c0_i32_1 = arith.constant 0 : i32
    return %c0_i32, %c0_i32_0 : i32, i32
  }
  func.func @transform_6(%arg0: i32) -> (i32, i32) {
    %c0_i32 = arith.constant 0 : i32
    %c0_i32_0 = arith.constant 0 : i32
    %c0_i32_1 = arith.constant 0 : i32
    return %c0_i32, %c0_i32_0 : i32, i32
  }
  func.func @transform_7(%arg0: i32) -> (i32, i32) {
    %c0_i32 = arith.constant 0 : i32
    %c0_i32_0 = arith.constant 0 : i32
    return %arg0, %c0_i32 : i32, i32
  }
}

</mosaic_0001>

<llo_original>
// kernel: xlayernet_forward.1
$region0: #{xlayernet_forward.1}
  #allocation0 [shape = 'u32[]', space=smem, size = 0x4, offset = 0x4, fixed_abs, tag = 'smem constant byte address 0x4 - core index']
  #allocation1 [shape = 'u32[144,128]{1,0:T(1,128)}', space=vmem, size = 0x12000, scoped, tag = 'internal scratch']
  %s0 = inlined_call_operand.vmem [shape: f32[256,32], index: 0, kind: input, shape index: {}]
  %s1 = inlined_call_operand.vmem [shape: f32[32,128], index: 1, kind: input, shape index: {}]
  %s2 = inlined_call_operand.vmem [shape: f32[1,128], index: 2, kind: input, shape index: {}]
  %s3 = inlined_call_operand.vmem [shape: f32[128,128], index: 3, kind: input, shape index: {}]
  %s4 = inlined_call_operand.vmem [shape: f32[1,128], index: 4, kind: input, shape index: {}]
  %s5 = inlined_call_operand.vmem [shape: f32[128,16], index: 5, kind: input, shape index: {}]
  %s6 = inlined_call_operand.vmem [shape: f32[1,16], index: 6, kind: input, shape index: {}]
  %s7 = inlined_call_operand.vmem [shape: f32[256,16], index: 7, kind: output, shape index: {}]
  %s8 = sld [smem:[#allocation0]]
  $region61: #{xlayernet_forward.1} parent=0
    _
  %s10 = ssub.s32 1, %s8
  %s11 = scalar_select 0, %s10, %s8
  loop: start=0, step=1, limit=6
  $region2: #{xlayernet_forward.1} parent=0 // loop_pre_header
    _
  $region3: #{xlayernet_forward.1} parent=0 // loop_header
    %s13 = sphi 0, %s17
    %p14 = scmp.ge.s32.totalorder %s13, 6
    %s23 = sphi 0, %s25
    %s26 = sphi 0, %s23
    %s27 = sphi 0, %s26
    %s43 = sphi 0, %s27
    %s47 = sphi 0, %s47
    %s49 = sphi 0, %s47
    %s50 = sphi 0, %s49
    %s64 = sphi 0, %s50
    %s68 = sphi 0, %s68
    %s70 = sphi 0, %s68
    %s71 = sphi 0, %s70
    %s85 = sphi 0, %s71
    %s89 = sphi 0, %s89
    %s91 = sphi 0, %s89
    %s92 = sphi 0, %s91
    %s106 = sphi 0, %s92
    %s110 = sphi 0, %s110
    %s112 = sphi 0, %s110
    %s113 = sphi 0, %s112
    %s127 = sphi 0, %s113
    %s131 = sphi 0, %s131
    %s133 = sphi 0, %s131
    %s134 = sphi 0, %s133
    %s148 = sphi 0, %s134
    %s152 = sphi 0, %s152
    %s154 = sphi 0, %s152
    %s155 = sphi 0, %s154
    %s169 = sphi 0, %s155
    %s175 = sphi 0, %s177
    %s178 = sphi 0, %s175
    %s179 = sphi 0, %s178
    %s195 = sphi 0, %s179
  $region4: #{xlayernet_forward.1} parent=0 // loop_header_branch
    %16 = sbr.rel (%p14) target = $region8
  $region5: #{xlayernet_forward.1} parent=0 // loop_body
    %s18 = ssub.s32 %s13, 1
    %s19 = ssub.s32 %s13, 2
    %s20 = sadd.s32 %s13, 1
    %s21 = ssub.s32 %s13, %s20
    %p22 = scmp.eq.s32.totalorder %s21, 0
    %s24 = sadd.s32 %s23, 1
    %s25 = scalar_select %p22, %s23, %s24
    %p28 = pneg %p22
    %p29 = scmp.eq.s32.totalorder %s13, 3
    %p30 = por %p28, %p29
    %p31 = scmp.ne.s32.totalorder %s23, %s26
    %p32 = scmp.eq.s32.totalorder %s13, 0
    %p33 = por %p31, %p32
    %p34 = scmp.ne.s32.totalorder %s23, %s26
    %p35 = scmp.eq.s32.totalorder %s18, 3
    %p36 = por %p34, %p35
    %p37 = scmp.ne.s32.totalorder %s26, %s27
    %p38 = scmp.eq.s32.totalorder %s18, 0
    %p39 = por %p37, %p38
    %p40 = scmp.ne.s32.totalorder %s26, %s27
    %p41 = scmp.eq.s32.totalorder %s19, 3
    %p42 = por %p40, %p41
    %p44 = scmp.ne.s32.totalorder %s27, %s43
    %p45 = scmp.eq.s32.totalorder %s19, 0
    %p46 = por %p44, %p45
    %s48 = sadd.s32 %s47, 1
    %p51 = scmp.eq.s32.totalorder %s13, 3
    %p52 = scmp.ne.s32.totalorder %s47, %s49
    %p53 = scmp.eq.s32.totalorder %s13, 0
    %p54 = por %p52, %p53
    %p55 = scmp.ne.s32.totalorder %s47, %s49
    %p56 = scmp.eq.s32.totalorder %s18, 3
    %p57 = por %p55, %p56
    %p58 = scmp.ne.s32.totalorder %s49, %s50
    %p59 = scmp.eq.s32.totalorder %s18, 0
    %p60 = por %p58, %p59
    %p61 = scmp.ne.s32.totalorder %s49, %s50
    %p62 = scmp.eq.s32.totalorder %s19, 3
    %p63 = por %p61, %p62
    %p65 = scmp.ne.s32.totalorder %s50, %s64
    %p66 = scmp.eq.s32.totalorder %s19, 0
    %p67 = por %p65, %p66
    %s69 = sadd.s32 %s68, 1
    %p72 = scmp.eq.s32.totalorder %s13, 3
    %p73 = scmp.ne.s32.totalorder %s68, %s70
    %p74 = scmp.eq.s32.totalorder %s13, 0
    %p75 = por %p73, %p74
    %p76 = scmp.ne.s32.totalorder %s68, %s70
    %p77 = scmp.eq.s32.totalorder %s18, 3
    %p78 = por %p76, %p77
    %p79 = scmp.ne.s32.totalorder %s70, %s71
    %p80 = scmp.eq.s32.totalorder %s18, 0
    %p81 = por %p79, %p80
    %p82 = scmp.ne.s32.totalorder %s70, %s71
    %p83 = scmp.eq.s32.totalorder %s19, 3
    %p84 = por %p82, %p83
    %p86 = scmp.ne.s32.totalorder %s71, %s85
    %p87 = scmp.eq.s32.totalorder %s19, 0
    %p88 = por %p86, %p87
    %s90 = sadd.s32 %s89, 1
    %p93 = scmp.eq.s32.totalorder %s13, 3
    %p94 = scmp.ne.s32.totalorder %s89, %s91
    %p95 = scmp.eq.s32.totalorder %s13, 0
    %p96 = por %p94, %p95
    %p97 = scmp.ne.s32.totalorder %s89, %s91
    %p98 = scmp.eq.s32.totalorder %s18, 3
    %p99 = por %p97, %p98
    %p100 = scmp.ne.s32.totalorder %s91, %s92
    %p101 = scmp.eq.s32.totalorder %s18, 0
    %p102 = por %p100, %p101
    %p103 = scmp.ne.s32.totalorder %s91, %s92
    %p104 = scmp.eq.s32.totalorder %s19, 3
    %p105 = por %p103, %p104
    %p107 = scmp.ne.s32.totalorder %s92, %s106
    %p108 = scmp.eq.s32.totalorder %s19, 0
    %p109 = por %p107, %p108
    %s111 = sadd.s32 %s110, 1
    %p114 = scmp.eq.s32.totalorder %s13, 3
    %p115 = scmp.ne.s32.totalorder %s110, %s112
    %p116 = scmp.eq.s32.totalorder %s13, 0
    %p117 = por %p115, %p116
    %p118 = scmp.ne.s32.totalorder %s110, %s112
    %p119 = scmp.eq.s32.totalorder %s18, 3
    %p120 = por %p118, %p119
    %p121 = scmp.ne.s32.totalorder %s112, %s113
    %p122 = scmp.eq.s32.totalorder %s18, 0
    %p123 = por %p121, %p122
    %p124 = scmp.ne.s32.totalorder %s112, %s113
    %p125 = scmp.eq.s32.totalorder %s19, 3
    %p126 = por %p124, %p125
    %p128 = scmp.ne.s32.totalorder %s113, %s127
    %p129 = scmp.eq.s32.totalorder %s19, 0
    %p130 = por %p128, %p129
    %s132 = sadd.s32 %s131, 1
    %p135 = scmp.eq.s32.totalorder %s13, 3
    %p136 = scmp.ne.s32.totalorder %s131, %s133
    %p137 = scmp.eq.s32.totalorder %s13, 0
    %p138 = por %p136, %p137
    %p139 = scmp.ne.s32.totalorder %s131, %s133
    %p140 = scmp.eq.s32.totalorder %s18, 3
    %p141 = por %p139, %p140
    %p142 = scmp.ne.s32.totalorder %s133, %s134
    %p143 = scmp.eq.s32.totalorder %s18, 0
    %p144 = por %p142, %p143
    %p145 = scmp.ne.s32.totalorder %s133, %s134
    %p146 = scmp.eq.s32.totalorder %s19, 3
    %p147 = por %p145, %p146
    %p149 = scmp.ne.s32.totalorder %s134, %s148
    %p150 = scmp.eq.s32.totalorder %s19, 0
    %p151 = por %p149, %p150
    %s153 = sadd.s32 %s152, 1
    %p156 = scmp.eq.s32.totalorder %s13, 3
    %p157 = scmp.ne.s32.totalorder %s152, %s154
    %p158 = scmp.eq.s32.totalorder %s13, 0
    %p159 = por %p157, %p158
    %p160 = scmp.ne.s32.totalorder %s152, %s154
    %p161 = scmp.eq.s32.totalorder %s18, 3
    %p162 = por %p160, %p161
    %p163 = scmp.ne.s32.totalorder %s154, %s155
    %p164 = scmp.eq.s32.totalorder %s18, 0
    %p165 = por %p163, %p164
    %p166 = scmp.ne.s32.totalorder %s154, %s155
    %p167 = scmp.eq.s32.totalorder %s19, 3
    %p168 = por %p166, %p167
    %p170 = scmp.ne.s32.totalorder %s155, %s169
    %p171 = scmp.eq.s32.totalorder %s19, 0
    %p172 = por %p170, %p171
    %s173 = ssub.s32 %s13, %s20
    %p174 = scmp.eq.s32.totalorder %s173, 0
    %s176 = sadd.s32 %s175, 1
    %s177 = scalar_select %p174, %s175, %s176
    %p180 = pneg %p174
    %p181 = scmp.eq.s32.totalorder %s13, 3
    %p182 = por %p180, %p181
    %p183 = scmp.ne.s32.totalorder %s175, %s178
    %p184 = scmp.eq.s32.totalorder %s13, 0
    %p185 = por %p183, %p184
    %p186 = scmp.ne.s32.totalorder %s175, %s178
    %p187 = scmp.eq.s32.totalorder %s18, 3
    %p188 = por %p186, %p187
    %p189 = scmp.ne.s32.totalorder %s178, %s179
    %p190 = scmp.eq.s32.totalorder %s18, 0
    %p191 = por %p189, %p190
    %p192 = scmp.ne.s32.totalorder %s178, %s179
    %p193 = scmp.eq.s32.totalorder %s19, 3
    %p194 = por %p192, %p193
    %p196 = scmp.ne.s32.totalorder %s179, %s195
    %p197 = scmp.eq.s32.totalorder %s19, 0
    %p198 = por %p196, %p197
    %p199 = scmp.le.s32.totalorder 1, %s13
    %p200 = scmp.lt.s32.totalorder %s13, 5
    %p201 = pnand %p199, %p200
    %p202 = pneg %p201
    // Predicated region
    $region9: #{xlayernet_forward.1} parent=5 // pred_check
      _
    $region10: #{xlayernet_forward.1} parent=5 // pred_check_branch
      %204 = sbr.rel (%p201) target = $region12
    $region11: #{xlayernet_forward.1} parent=5 // pred_region
      %s205 = ssub.s32 %s13, 1
      // Predicated region
      $region13: #{xlayernet_forward.1} parent=11 // pred_check
        %p206 = pneg %p60
      $region14: #{xlayernet_forward.1} parent=11 // pred_check_branch
        %208 = sbr.rel (%p206) target = $region16
      $region15: #{xlayernet_forward.1} parent=11 // pred_region
        _
      $region16: #{xlayernet_forward.1} parent=11 // pred_fallthru
        _
      // Predicated region
      $region17: #{xlayernet_forward.1} parent=11 // pred_check
        %p209 = pneg %p81
      $region18: #{xlayernet_forward.1} parent=11 // pred_check_branch
        %211 = sbr.rel (%p209) target = $region20
      $region19: #{xlayernet_forward.1} parent=11 // pred_region
        _
      $region20: #{xlayernet_forward.1} parent=11 // pred_fallthru
        _
      // Predicated region
      $region21: #{xlayernet_forward.1} parent=11 // pred_check
        %p212 = pneg %p102
      $region22: #{xlayernet_forward.1} parent=11 // pred_check_branch
        %214 = sbr.rel (%p212) target = $region24
      $region23: #{xlayernet_forward.1} parent=11 // pred_region
        _
      $region24: #{xlayernet_forward.1} parent=11 // pred_fallthru
        _
      // Predicated region
      $region25: #{xlayernet_forward.1} parent=11 // pred_check
        %p215 = pneg %p123
      $region26: #{xlayernet_forward.1} parent=11 // pred_check_branch
        %217 = sbr.rel (%p215) target = $region28
      $region27: #{xlayernet_forward.1} parent=11 // pred_region
        _
      $region28: #{xlayernet_forward.1} parent=11 // pred_fallthru
        _
      // Predicated region
      $region29: #{xlayernet_forward.1} parent=11 // pred_check
        %p218 = pneg %p144
      $region30: #{xlayernet_forward.1} parent=11 // pred_check_branch
        %220 = sbr.rel (%p218) target = $region32
      $region31: #{xlayernet_forward.1} parent=11 // pred_region
        _
      $region32: #{xlayernet_forward.1} parent=11 // pred_fallthru
        _
      // Predicated region
      $region33: #{xlayernet_forward.1} parent=11 // pred_check
        %p221 = pneg %p165
      $region34: #{xlayernet_forward.1} parent=11 // pred_check_branch
        %223 = sbr.rel (%p221) target = $region36
      $region35: #{xlayernet_forward.1} parent=11 // pred_region
        _
      $region36: #{xlayernet_forward.1} parent=11 // pred_fallthru
        _
    $region12: #{xlayernet_forward.1} parent=5 // pred_fallthru
      _
    %p224 = scmp.lt.s32.totalorder %s13, 4
    // Predicated region
    $region37: #{xlayernet_forward.1} parent=5 // pred_check
      %p225 = pneg %p224
    $region38: #{xlayernet_forward.1} parent=5 // pred_check_branch
      %227 = sbr.rel (%p225) target = $region40
    $region39: #{xlayernet_forward.1} parent=5 // pred_region
      // Predicated region
      $region41: #{xlayernet_forward.1} parent=39 // pred_check
        %p228 = pneg %p33
      $region42: #{xlayernet_forward.1} parent=39 // pred_check_branch
        %230 = sbr.rel (%p228) target = $region44
      $region43: #{xlayernet_forward.1} parent=39 // pred_region
        %s231 = smul.u32 8, %s13
        %p232 = scmp.lt.s32.totalorder %s231, 31
        %s233 = scalar_select %p232, %s231, 31
        %s234 = smul.addr %s233, 8
        %s235 = scalar_lea.vmem %s0, %s234
        %s236 = smul.u32 8, %s13
      $region44: #{xlayernet_forward.1} parent=39 // pred_fallthru
        _
    $region40: #{xlayernet_forward.1} parent=5 // pred_fallthru
      _
    %p237 = scmp.le.s32.totalorder 1, %s13
    %p238 = scmp.lt.s32.totalorder %s13, 5
    %p239 = pnand %p237, %p238
    %p240 = pneg %p239
    // Predicated region
    $region45: #{xlayernet_forward.1} parent=5 // pred_check
      _
    $region46: #{xlayernet_forward.1} parent=5 // pred_check_branch
      %242 = sbr.rel (%p239) target = $region48
    $region47: #{xlayernet_forward.1} parent=5 // pred_region
      %s243 = ssub.s32 %s13, 1
      %s244 = smul.u32 8, %s18
      %p245 = scmp.lt.s32.totalorder %s244, 31
      %s246 = scalar_select %p245, %s244, 31
      %s247 = smul.addr %s246, 8
      %s248 = scalar_lea.vmem %s0, %s247
      %p249 = pneg %p39
      %p250 = pneg %p36
      %p251 = pneg %p60
      %p252 = pneg %p57
      %p253 = pneg %p81
      %p254 = pneg %p78
      %p255 = pneg %p102
      %p256 = pneg %p99
      %p257 = pneg %p123
      %p258 = pneg %p120
      %p259 = pneg %p144
      %p260 = pneg %p141
      %p261 = pneg %p165
      %p262 = pneg %p162
      %p263 = pneg %p191
      %p264 = pneg %p188
      %s265 = smul.u32 8, %s18
      %p266 = scmp.lt.s32.totalorder %s265, 31
      %s267 = scalar_select %p266, %s265, 31
      %s268 = smul.addr %s267, 8
      %s269 = scalar_lea.vmem %s7, %s268
      %s270 = smul.u32 8, %s18
      %p271 = scmp.lt.s32.totalorder %s270, 31
      %s272 = scalar_select %p271, %s270, 31
      %s273 = smul.addr %s272, 8
      %s274 = scalar_lea.vmem %s0, %s273
      %s275 = smul.u32 8, %s18
      %s276 = smul.u32 8, %s18
      %p277 = scmp.lt.s32.totalorder %s276, 31
      %s278 = scalar_select %p277, %s276, 31
      %s279 = smul.addr %s278, 8
      %s280 = scalar_lea.vmem %s7, %s279
      %s281 = smul.u32 8, %s18
      %v282 = vld [vmem:[%s274] sm:$0xff]
      %v283 = vld [vmem:[%s274 + $0x8] sm:$0xff]
      %v284 = vld [vmem:[%s274 + $0x10] sm:$0xff]
      %v285 = vld [vmem:[%s274 + $0x18] sm:$0xff]
      %v286 = vld [vmem:[%s274 + $0x20] sm:$0xff]
      %v287 = vld [vmem:[%s274 + $0x28] sm:$0xff]
      %v288 = vld [vmem:[%s274 + $0x30] sm:$0xff]
      %v289 = vld [vmem:[%s274 + $0x38] sm:$0xff]
      %v290 = vld [vmem:[%s1] sm:$0xff]
      %v291 = vld [vmem:[%s1 + $0x8] sm:$0xff]
      %v292 = vld [vmem:[%s1 + $0x10] sm:$0xff]
      %v293 = vld [vmem:[%s1 + $0x18] sm:$0xff]
      %v294 = vld [vmem:[%s2] sm:$0x1]
      %v296 = vlaneseq
      %v297 = vshrl.u32 %v296, 7
      %v298 = vsub.s32 0, %v297
      %v299 = vrot.slane %v294, %v298
      %vm301 = vcmask 261120
      %v303 = vsel %vm301, %v282, 0
      %v306 = vsel %vm301, %v283, 0
      %v309 = vsel %vm301, %v284, 0
      %v312 = vsel %vm301, %v285, 0
      %v315 = vsel %vm301, %v286, 0
      %v318 = vsel %vm301, %v287, 0
      %v321 = vsel %vm301, %v288, 0
      %v324 = vsel %vm301, %v289, 0
      %326 = vmatprep.subr.mxu0 0.0
      %327 = vmatpush1.msra.mxu0 0.0
      %328 = vmatprep.subr.mxu0 0.0
      %329 = vmatpush1.msra.mxu0 0.0
      %330 = vmatprep.subr.mxu0 0.0
      %331 = vmatpush1.msra.mxu0 0.0
      %332 = vmatprep.subr.mxu0 0.0
      %333 = vmatpush1.msra.mxu0 0.0
      %334 = vmatprep.subr.mxu0 0.0
      %335 = vmatpush1.msra.mxu0 0.0
      %336 = vmatprep.subr.mxu0 0.0
      %337 = vmatpush1.msra.mxu0 0.0
      %338 = vmatprep.subr.mxu0 0.0
      %339 = vmatpush1.msra.mxu0 0.0
      %340 = vmatprep.subr.mxu0 0.0
      %341 = vmatpush1.msra.mxu0 0.0
      %342 = vmatprep.subr.mxu0 0.0
      %343 = vmatpush1.msra.mxu0 0.0
      %344 = vmatprep.subr.mxu0 0.0
      %345 = vmatpush1.msra.mxu0 0.0
      %346 = vmatprep.subr.mxu0 0.0
      %347 = vmatpush1.msra.mxu0 0.0
      %348 = vmatprep.subr.mxu0 0.0
      %349 = vmatpush1.msra.mxu0 0.0
      %350 = vmatprep.subr.mxu0 0.0
      %351 = vmatpush1.msra.mxu0 %v293
      %352 = vmatprep.subr.mxu0 0.0
      %353 = vmatpush1.msra.mxu0 %v292
      %354 = vmatprep.subr.mxu0 0.0
      %355 = vmatpush1.msra.mxu0 %v291
      %356 = vmatprep.subr.mxu0 0.0
      %357 = vmatpush1.msra.mxu0 %v290
      %358 = vmatprep.subr.mxu0 0.0
      %359 = vmatpush2.msra.mxu0 0.0
      %360 = vmatprep.subr.mxu0 0.0
      %361 = vmatpush2.msra.mxu0 0.0
      %362 = vmatprep.subr.mxu0 0.0
      %363 = vmatpush2.msra.mxu0 0.0
      %364 = vmatprep.subr.mxu0 0.0
      %365 = vmatpush2.msra.mxu0 0.0
      %366 = vmatprep.subr.mxu0 0.0
      %367 = vmatpush2.msra.mxu0 0.0
      %368 = vmatprep.subr.mxu0 0.0
      %369 = vmatpush2.msra.mxu0 0.0
      %370 = vmatprep.subr.mxu0 0.0
      %371 = vmatpush2.msra.mxu0 0.0
      %372 = vmatprep.subr.mxu0 0.0
      %373 = vmatpush2.msra.mxu0 0.0
      %374 = vmatprep.subr.mxu0 0.0
      %375 = vmatpush2.msra.mxu0 0.0
      %376 = vmatprep.subr.mxu0 0.0
      %377 = vmatpush2.msra.mxu0 0.0
      %378 = vmatprep.subr.mxu0 0.0
      %379 = vmatpush2.msra.mxu0 0.0
      %380 = vmatprep.subr.mxu0 0.0
      %381 = vmatpush2.msra.mxu0 0.0
      %382 = vmatprep.subr.mxu0 0.0
      %383 = vmatpush2.msra.mxu0 0.0
      %384 = vmatprep.subr.mxu0 0.0
      %385 = vmatpush2.msra.mxu0 0.0
      %386 = vmatprep.subr.mxu0 0.0
      %387 = vmatpush2.msra.mxu0 0.0
      %388 = vmatprep.subr.mxu0 0.0
      %389 = vmatpush2.msra.mxu0 0.0
      %390 = vmatprep.mubr.f32.mxu0 0.0
      %391 = vmatmul.mubr.f32.gmra.mxu0 %v303
      %v392 = vpop.f32.mrf.mxu0
      %v393 = vadd.f32 %v299, %v392
      %v394 = vpop.f32.mrf.mxu0
      %395 = vmatprep.mubr.f32.mxu0 0.0
      %396 = vmatmul.mubr.f32.gmra.mxu0 %v306
      %v397 = vpop.f32.mrf.mxu0
      %v398 = vadd.f32 %v299, %v397
      %v399 = vpop.f32.mrf.mxu0
      %400 = vmatprep.mubr.f32.mxu0 0.0
      %401 = vmatmul.mubr.f32.gmra.mxu0 %v309
      %v402 = vpop.f32.mrf.mxu0
      %v403 = vadd.f32 %v299, %v402
      %v404 = vpop.f32.mrf.mxu0
      %405 = vmatprep.mubr.f32.mxu0 0.0
      %406 = vmatmul.mubr.f32.gmra.mxu0 %v312
      %v407 = vpop.f32.mrf.mxu0
      %v408 = vadd.f32 %v299, %v407
      %v409 = vpop.f32.mrf.mxu0
      %410 = vmatprep.mubr.f32.mxu0 0.0
      %411 = vmatmul.mubr.f32.gmra.mxu0 %v315
      %v412 = vpop.f32.mrf.mxu0
      %v413 = vadd.f32 %v299, %v412
      %v414 = vpop.f32.mrf.mxu0
      %415 = vmatprep.mubr.f32.mxu0 0.0
      %416 = vmatmul.mubr.f32.gmra.mxu0 %v318
      %v417 = vpop.f32.mrf.mxu0
      %v418 = vadd.f32 %v299, %v417
      %v419 = vpop.f32.mrf.mxu0
      %420 = vmatprep.mubr.f32.mxu0 0.0
      %421 = vmatmul.mubr.f32.gmra.mxu0 %v321
      %v422 = vpop.f32.mrf.mxu0
      %v423 = vadd.f32 %v299, %v422
      %v424 = vpop.f32.mrf.mxu0
      %425 = vmatprep.mubr.f32.mxu0 0.0
      %426 = vmatmul.mubr.f32.gmra.mxu0 %v324
      %v427 = vpop.f32.mrf.mxu0
      %v428 = vadd.f32 %v299, %v427
      %v429 = vpop.f32.mrf.mxu0
      %430 = vdwg.mxu0
      %v431 = vmax.f32 %v393, 0.0
      %v432 = vmax.f32 %v398, 0.0
      %v433 = vmax.f32 %v403, 0.0
      %v434 = vmax.f32 %v408, 0.0
      %v435 = vmax.f32 %v413, 0.0
      %v436 = vmax.f32 %v418, 0.0
      %v437 = vmax.f32 %v423, 0.0
      %v438 = vmax.f32 %v428, 0.0
      %v439 = vld [vmem:[%s3] sm:$0xff]
      %v440 = vld [vmem:[%s3 + $0x8] sm:$0xff]
      %v441 = vld [vmem:[%s3 + $0x10] sm:$0xff]
      %v442 = vld [vmem:[%s3 + $0x18] sm:$0xff]
      %v443 = vld [vmem:[%s3 + $0x20] sm:$0xff]
      %v444 = vld [vmem:[%s3 + $0x28] sm:$0xff]
      %v445 = vld [vmem:[%s3 + $0x30] sm:$0xff]
      %v446 = vld [vmem:[%s3 + $0x38] sm:$0xff]
      %v447 = vld [vmem:[%s3 + $0x40] sm:$0xff]
      %v448 = vld [vmem:[%s3 + $0x48] sm:$0xff]
      %v449 = vld [vmem:[%s3 + $0x50] sm:$0xff]
      %v450 = vld [vmem:[%s3 + $0x58] sm:$0xff]
      %v451 = vld [vmem:[%s3 + $0x60] sm:$0xff]
      %v452 = vld [vmem:[%s3 + $0x68] sm:$0xff]
      %v453 = vld [vmem:[%s3 + $0x70] sm:$0xff]
      %v454 = vld [vmem:[%s3 + $0x78] sm:$0xff]
      %v455 = vld [vmem:[%s4] sm:$0x1]
      %v457 = vlaneseq
      %v458 = vshrl.u32 %v457, 7
      %v459 = vsub.s32 0, %v458
      %v460 = vrot.slane %v455, %v459
      %462 = vmatprep.subr.mxu0 0.0
      %463 = vmatpush1.msra.mxu0 %v454
      %464 = vmatprep.subr.mxu0 0.0
      %465 = vmatpush1.msra.mxu0 %v453
      %466 = vmatprep.subr.mxu0 0.0
      %467 = vmatpush1.msra.mxu0 %v452
      %468 = vmatprep.subr.mxu0 0.0
      %469 = vmatpush1.msra.mxu0 %v451
      %470 = vmatprep.subr.mxu0 0.0
      %471 = vmatpush1.msra.mxu0 %v450
      %472 = vmatprep.subr.mxu0 0.0
      %473 = vmatpush1.msra.mxu0 %v449
      %474 = vmatprep.subr.mxu0 0.0
      %475 = vmatpush1.msra.mxu0 %v448
      %476 = vmatprep.subr.mxu0 0.0
      %477 = vmatpush1.msra.mxu0 %v447
      %478 = vmatprep.subr.mxu0 0.0
      %479 = vmatpush1.msra.mxu0 %v446
      %480 = vmatprep.subr.mxu0 0.0
      %481 = vmatpush1.msra.mxu0 %v445
      %482 = vmatprep.subr.mxu0 0.0
      %483 = vmatpush1.msra.mxu0 %v444
      %484 = vmatprep.subr.mxu0 0.0
      %485 = vmatpush1.msra.mxu0 %v443
      %486 = vmatprep.subr.mxu0 0.0
      %487 = vmatpush1.msra.mxu0 %v442
      %488 = vmatprep.subr.mxu0 0.0
      %489 = vmatpush1.msra.mxu0 %v441
      %490 = vmatprep.subr.mxu0 0.0
      %491 = vmatpush1.msra.mxu0 %v440
      %492 = vmatprep.subr.mxu0 0.0
      %493 = vmatpush1.msra.mxu0 %v439
      %494 = vmatprep.subr.mxu0 0.0
      %495 = vmatpush2.msra.mxu0 0.0
      %496 = vmatprep.subr.mxu0 0.0
      %497 = vmatpush2.msra.mxu0 0.0
      %498 = vmatprep.subr.mxu0 0.0
      %499 = vmatpush2.msra.mxu0 0.0
      %500 = vmatprep.subr.mxu0 0.0
      %501 = vmatpush2.msra.mxu0 0.0
      %502 = vmatprep.subr.mxu0 0.0
      %503 = vmatpush2.msra.mxu0 0.0
      %504 = vmatprep.subr.mxu0 0.0
      %505 = vmatpush2.msra.mxu0 0.0
      %506 = vmatprep.subr.mxu0 0.0
      %507 = vmatpush2.msra.mxu0 0.0
      %508 = vmatprep.subr.mxu0 0.0
      %509 = vmatpush2.msra.mxu0 0.0
      %510 = vmatprep.subr.mxu0 0.0
      %511 = vmatpush2.msra.mxu0 0.0
      %512 = vmatprep.subr.mxu0 0.0
      %513 = vmatpush2.msra.mxu0 0.0
      %514 = vmatprep.subr.mxu0 0.0
      %515 = vmatpush2.msra.mxu0 0.0
      %516 = vmatprep.subr.mxu0 0.0
      %517 = vmatpush2.msra.mxu0 0.0
      %518 = vmatprep.subr.mxu0 0.0
      %519 = vmatpush2.msra.mxu0 0.0
      %520 = vmatprep.subr.mxu0 0.0
      %521 = vmatpush2.msra.mxu0 0.0
      %522 = vmatprep.subr.mxu0 0.0
      %523 = vmatpush2.msra.mxu0 0.0
      %524 = vmatprep.subr.mxu0 0.0
      %525 = vmatpush2.msra.mxu0 0.0
      %526 = vmatprep.mubr.f32.mxu0 0.0
      %527 = vmatmul.mubr.f32.gmra.mxu0 %v431
      %v528 = vpop.f32.mrf.mxu0
      %v529 = vadd.f32 %v460, %v528
      %v530 = vpop.f32.mrf.mxu0
      %531 = vmatprep.mubr.f32.mxu0 0.0
      %532 = vmatmul.mubr.f32.gmra.mxu0 %v432
      %v533 = vpop.f32.mrf.mxu0
      %v534 = vadd.f32 %v460, %v533
      %v535 = vpop.f32.mrf.mxu0
      %536 = vmatprep.mubr.f32.mxu0 0.0
      %537 = vmatmul.mubr.f32.gmra.mxu0 %v433
      %v538 = vpop.f32.mrf.mxu0
      %v539 = vadd.f32 %v460, %v538
      %v540 = vpop.f32.mrf.mxu0
      %541 = vmatprep.mubr.f32.mxu0 0.0
      %542 = vmatmul.mubr.f32.gmra.mxu0 %v434
      %v543 = vpop.f32.mrf.mxu0
      %v544 = vadd.f32 %v460, %v543
      %v545 = vpop.f32.mrf.mxu0
      %546 = vmatprep.mubr.f32.mxu0 0.0
      %547 = vmatmul.mubr.f32.gmra.mxu0 %v435
      %v548 = vpop.f32.mrf.mxu0
      %v549 = vadd.f32 %v460, %v548
      %v550 = vpop.f32.mrf.mxu0
      %551 = vmatprep.mubr.f32.mxu0 0.0
      %552 = vmatmul.mubr.f32.gmra.mxu0 %v436
      %v553 = vpop.f32.mrf.mxu0
      %v554 = vadd.f32 %v460, %v553
      %v555 = vpop.f32.mrf.mxu0
      %556 = vmatprep.mubr.f32.mxu0 0.0
      %557 = vmatmul.mubr.f32.gmra.mxu0 %v437
      %v558 = vpop.f32.mrf.mxu0
      %v559 = vadd.f32 %v460, %v558
      %v560 = vpop.f32.mrf.mxu0
      %561 = vmatprep.mubr.f32.mxu0 0.0
      %562 = vmatmul.mubr.f32.gmra.mxu0 %v438
      %v563 = vpop.f32.mrf.mxu0
      %v564 = vadd.f32 %v460, %v563
      %v565 = vpop.f32.mrf.mxu0
      %566 = vdwg.mxu0
      %v567 = vmax.f32 %v529, 0.0
      %v568 = vmax.f32 %v534, 0.0
      %v569 = vmax.f32 %v539, 0.0
      %v570 = vmax.f32 %v544, 0.0
      %v571 = vmax.f32 %v549, 0.0
      %v572 = vmax.f32 %v554, 0.0
      %v573 = vmax.f32 %v559, 0.0
      %v574 = vmax.f32 %v564, 0.0
      %v575 = vld [vmem:[%s5] sm:$0xff]
      %v576 = vld [vmem:[%s5 + $0x8] sm:$0xff]
      %v577 = vld [vmem:[%s5 + $0x10] sm:$0xff]
      %v578 = vld [vmem:[%s5 + $0x18] sm:$0xff]
      %v579 = vld [vmem:[%s5 + $0x20] sm:$0xff]
      %v580 = vld [vmem:[%s5 + $0x28] sm:$0xff]
      %v581 = vld [vmem:[%s5 + $0x30] sm:$0xff]
      %v582 = vld [vmem:[%s5 + $0x38] sm:$0xff]
      %v583 = vld [vmem:[%s5 + $0x40] sm:$0xff]
      %v584 = vld [vmem:[%s5 + $0x48] sm:$0xff]
      %v585 = vld [vmem:[%s5 + $0x50] sm:$0xff]
      %v586 = vld [vmem:[%s5 + $0x58] sm:$0xff]
      %v587 = vld [vmem:[%s5 + $0x60] sm:$0xff]
      %v588 = vld [vmem:[%s5 + $0x68] sm:$0xff]
      %v589 = vld [vmem:[%s5 + $0x70] sm:$0xff]
      %v590 = vld [vmem:[%s5 + $0x78] sm:$0xff]
      %v591 = vld [vmem:[%s6] sm:$0x1]
      %v593 = vlaneseq
      %v594 = vshrl.u32 %v593, 7
      %v595 = vsub.s32 0, %v594
      %v596 = vrot.slane %v591, %v595
      %598 = vmatprep.subr.mxu0 0.0
      %599 = vmatpush1.msra.mxu0 %v590
      %600 = vmatprep.subr.mxu0 0.0
      %601 = vmatpush1.msra.mxu0 %v589
      %602 = vmatprep.subr.mxu0 0.0
      %603 = vmatpush1.msra.mxu0 %v588
      %604 = vmatprep.subr.mxu0 0.0
      %605 = vmatpush1.msra.mxu0 %v587
      %606 = vmatprep.subr.mxu0 0.0
      %607 = vmatpush1.msra.mxu0 %v586
      %608 = vmatprep.subr.mxu0 0.0
      %609 = vmatpush1.msra.mxu0 %v585
      %610 = vmatprep.subr.mxu0 0.0
      %611 = vmatpush1.msra.mxu0 %v584
      %612 = vmatprep.subr.mxu0 0.0
      %613 = vmatpush1.msra.mxu0 %v583
      %614 = vmatprep.subr.mxu0 0.0
      %615 = vmatpush1.msra.mxu0 %v582
      %616 = vmatprep.subr.mxu0 0.0
      %617 = vmatpush1.msra.mxu0 %v581
      %618 = vmatprep.subr.mxu0 0.0
      %619 = vmatpush1.msra.mxu0 %v580
      %620 = vmatprep.subr.mxu0 0.0
      %621 = vmatpush1.msra.mxu0 %v579
      %622 = vmatprep.subr.mxu0 0.0
      %623 = vmatpush1.msra.mxu0 %v578
      %624 = vmatprep.subr.mxu0 0.0
      %625 = vmatpush1.msra.mxu0 %v577
      %626 = vmatprep.subr.mxu0 0.0
      %627 = vmatpush1.msra.mxu0 %v576
      %628 = vmatprep.subr.mxu0 0.0
      %629 = vmatpush1.msra.mxu0 %v575
      %630 = vmatprep.subr.mxu0 0.0
      %631 = vmatpush2.msra.mxu0 0.0
      %632 = vmatprep.subr.mxu0 0.0
      %633 = vmatpush2.msra.mxu0 0.0
      %634 = vmatprep.subr.mxu0 0.0
      %635 = vmatpush2.msra.mxu0 0.0
      %636 = vmatprep.subr.mxu0 0.0
      %637 = vmatpush2.msra.mxu0 0.0
      %638 = vmatprep.subr.mxu0 0.0
      %639 = vmatpush2.msra.mxu0 0.0
      %640 = vmatprep.subr.mxu0 0.0
      %641 = vmatpush2.msra.mxu0 0.0
      %642 = vmatprep.subr.mxu0 0.0
      %643 = vmatpush2.msra.mxu0 0.0
      %644 = vmatprep.subr.mxu0 0.0
      %645 = vmatpush2.msra.mxu0 0.0
      %646 = vmatprep.subr.mxu0 0.0
      %647 = vmatpush2.msra.mxu0 0.0
      %648 = vmatprep.subr.mxu0 0.0
      %649 = vmatpush2.msra.mxu0 0.0
      %650 = vmatprep.subr.mxu0 0.0
      %651 = vmatpush2.msra.mxu0 0.0
      %652 = vmatprep.subr.mxu0 0.0
      %653 = vmatpush2.msra.mxu0 0.0
      %654 = vmatprep.subr.mxu0 0.0
      %655 = vmatpush2.msra.mxu0 0.0
      %656 = vmatprep.subr.mxu0 0.0
      %657 = vmatpush2.msra.mxu0 0.0
      %658 = vmatprep.subr.mxu0 0.0
      %659 = vmatpush2.msra.mxu0 0.0
      %660 = vmatprep.subr.mxu0 0.0
      %661 = vmatpush2.msra.mxu0 0.0
      %662 = vmatprep.mubr.f32.mxu0 0.0
      %663 = vmatmul.mubr.f32.gmra.mxu0 %v567
      %v664 = vpop.f32.mrf.mxu0
      %v665 = vadd.f32 %v596, %v664
      %v666 = vpop.f32.mrf.mxu0
      %667 = vmatprep.mubr.f32.mxu0 0.0
      %668 = vmatmul.mubr.f32.gmra.mxu0 %v568
      %v669 = vpop.f32.mrf.mxu0
      %v670 = vadd.f32 %v596, %v669
      %v671 = vpop.f32.mrf.mxu0
      %672 = vmatprep.mubr.f32.mxu0 0.0
      %673 = vmatmul.mubr.f32.gmra.mxu0 %v569
      %v674 = vpop.f32.mrf.mxu0
      %v675 = vadd.f32 %v596, %v674
      %v676 = vpop.f32.mrf.mxu0
      %677 = vmatprep.mubr.f32.mxu0 0.0
      %678 = vmatmul.mubr.f32.gmra.mxu0 %v570
      %v679 = vpop.f32.mrf.mxu0
      %v680 = vadd.f32 %v596, %v679
      %v681 = vpop.f32.mrf.mxu0
      %682 = vmatprep.mubr.f32.mxu0 0.0
      %683 = vmatmul.mubr.f32.gmra.mxu0 %v571
      %v684 = vpop.f32.mrf.mxu0
      %v685 = vadd.f32 %v596, %v684
      %v686 = vpop.f32.mrf.mxu0
      %687 = vmatprep.mubr.f32.mxu0 0.0
      %688 = vmatmul.mubr.f32.gmra.mxu0 %v572
      %v689 = vpop.f32.mrf.mxu0
      %v690 = vadd.f32 %v596, %v689
      %v691 = vpop.f32.mrf.mxu0
      %692 = vmatprep.mubr.f32.mxu0 0.0
      %693 = vmatmul.mubr.f32.gmra.mxu0 %v573
      %v694 = vpop.f32.mrf.mxu0
      %v695 = vadd.f32 %v596, %v694
      %v696 = vpop.f32.mrf.mxu0
      %697 = vmatprep.mubr.f32.mxu0 0.0
      %698 = vmatmul.mubr.f32.gmra.mxu0 %v574
      %v699 = vpop.f32.mrf.mxu0
      %v700 = vadd.f32 %v596, %v699
      %v701 = vpop.f32.mrf.mxu0
      %702 = vdwg.mxu0
      %v703 = vmax.f32 %v665, 0.0
      %v704 = vmax.f32 %v670, 0.0
      %v705 = vmax.f32 %v675, 0.0
      %v706 = vmax.f32 %v680, 0.0
      %v707 = vmax.f32 %v685, 0.0
      %v708 = vmax.f32 %v690, 0.0
      %v709 = vmax.f32 %v695, 0.0
      %v710 = vmax.f32 %v700, 0.0
      %vm711 = vcmask 130048
      %v712 = vsel %vm711, %v703, -inf
      %713 = vmax.xlane.f32.xlu0 %v712
      %v714 = vpop.xlane.xlu0 %713
      %v715 = vsel %vm711, %v704, -inf
      %716 = vmax.xlane.f32.xlu0 %v715
      %v717 = vpop.xlane.xlu0 %716
      %v718 = vsel %vm711, %v705, -inf
      %719 = vmax.xlane.f32.xlu0 %v718
      %v720 = vpop.xlane.xlu0 %719
      %v721 = vsel %vm711, %v706, -inf
      %722 = vmax.xlane.f32.xlu0 %v721
      %v723 = vpop.xlane.xlu0 %722
      %v724 = vsel %vm711, %v707, -inf
      %725 = vmax.xlane.f32.xlu0 %v724
      %v726 = vpop.xlane.xlu0 %725
      %v727 = vsel %vm711, %v708, -inf
      %728 = vmax.xlane.f32.xlu0 %v727
      %v729 = vpop.xlane.xlu0 %728
      %v730 = vsel %vm711, %v709, -inf
      %731 = vmax.xlane.f32.xlu0 %v730
      %v732 = vpop.xlane.xlu0 %731
      %v733 = vsel %vm711, %v710, -inf
      %734 = vmax.xlane.f32.xlu0 %v733
      %v735 = vpop.xlane.xlu0 %734
      %v736 = vsub.f32 %v703, %v714
      %v737 = vsub.f32 %v704, %v717
      %v738 = vsub.f32 %v705, %v720
      %v739 = vsub.f32 %v706, %v723
      %v740 = vsub.f32 %v707, %v726
      %v741 = vsub.f32 %v708, %v729
      %v742 = vsub.f32 %v709, %v732
      %v743 = vsub.f32 %v710, %v735
      %v744 = vmul.f32 %v736, 1.442695
      %v745 = vpow.pop %v744
      %v746 = vmul.f32 %v737, 1.442695
      %v747 = vpow.pop %v746
      %v748 = vmul.f32 %v738, 1.442695
      %v749 = vpow.pop %v748
      %v750 = vmul.f32 %v739, 1.442695
      %v751 = vpow.pop %v750
      %v752 = vmul.f32 %v740, 1.442695
      %v753 = vpow.pop %v752
      %v754 = vmul.f32 %v741, 1.442695
      %v755 = vpow.pop %v754
      %v756 = vmul.f32 %v742, 1.442695
      %v757 = vpow.pop %v756
      %v758 = vmul.f32 %v743, 1.442695
      %v759 = vpow.pop %v758
      %v760 = vsel %vm711, %v745, 0.0
      %761 = vadd.xlane.f32.xlu0 %v760
      %v762 = vpop.xlane.xlu0 %761
      %v763 = vsel %vm711, %v747, 0.0
      %764 = vadd.xlane.f32.xlu0 %v763
      %v765 = vpop.xlane.xlu0 %764
      %v766 = vsel %vm711, %v749, 0.0
      %767 = vadd.xlane.f32.xlu0 %v766
      %v768 = vpop.xlane.xlu0 %767
      %v769 = vsel %vm711, %v751, 0.0
      %770 = vadd.xlane.f32.xlu0 %v769
      %v771 = vpop.xlane.xlu0 %770
      %v772 = vsel %vm711, %v753, 0.0
      %773 = vadd.xlane.f32.xlu0 %v772
      %v774 = vpop.xlane.xlu0 %773
      %v775 = vsel %vm711, %v755, 0.0
      %776 = vadd.xlane.f32.xlu0 %v775
      %v777 = vpop.xlane.xlu0 %776
      %v778 = vsel %vm711, %v757, 0.0
      %779 = vadd.xlane.f32.xlu0 %v778
      %v780 = vpop.xlane.xlu0 %779
      %v781 = vsel %vm711, %v759, 0.0
      %782 = vadd.xlane.f32.xlu0 %v781
      %v783 = vpop.xlane.xlu0 %782
      %v784 = vlog2.pop %v762
      %v785 = vmul.f32 %v784, 0.6931472
      %v786 = vlog2.pop %v765
      %v787 = vmul.f32 %v786, 0.6931472
      %v788 = vlog2.pop %v768
      %v789 = vmul.f32 %v788, 0.6931472
      %v790 = vlog2.pop %v771
      %v791 = vmul.f32 %v790, 0.6931472
      %v792 = vlog2.pop %v774
      %v793 = vmul.f32 %v792, 0.6931472
      %v794 = vlog2.pop %v777
      %v795 = vmul.f32 %v794, 0.6931472
      %v796 = vlog2.pop %v780
      %v797 = vmul.f32 %v796, 0.6931472
      %v798 = vlog2.pop %v783
      %v799 = vmul.f32 %v798, 0.6931472
      %v800 = vsub.f32 %v736, %v785
      %v801 = vsub.f32 %v737, %v787
      %v802 = vsub.f32 %v738, %v789
      %v803 = vsub.f32 %v739, %v791
      %v804 = vsub.f32 %v740, %v793
      %v805 = vsub.f32 %v741, %v795
      %v806 = vsub.f32 %v742, %v797
      %v807 = vsub.f32 %v743, %v799
      %808 = vst.msk [vmem:[%s280] sm:$0xff] %vm711, %v800
      %809 = vst.msk [vmem:[%s280 + $0x8] sm:$0xff] %vm711, %v801
      %810 = vst.msk [vmem:[%s280 + $0x10] sm:$0xff] %vm711, %v802
      %811 = vst.msk [vmem:[%s280 + $0x18] sm:$0xff] %vm711, %v803
      %812 = vst.msk [vmem:[%s280 + $0x20] sm:$0xff] %vm711, %v804
      %813 = vst.msk [vmem:[%s280 + $0x28] sm:$0xff] %vm711, %v805
      %814 = vst.msk [vmem:[%s280 + $0x30] sm:$0xff] %vm711, %v806
      %815 = vst.msk [vmem:[%s280 + $0x38] sm:$0xff] %vm711, %v807
      %s816 = smul.u32 8, %s18
      %p817 = scmp.lt.s32.totalorder %s816, 31
      %s818 = scalar_select %p817, %s816, 31
      %s819 = smul.addr %s818, 8
      %s820 = scalar_lea.vmem %s7, %s819
      // Predicated region
      $region49: #{xlayernet_forward.1} parent=47 // pred_check
        %p821 = pneg %p188
      $region50: #{xlayernet_forward.1} parent=47 // pred_check_branch
        %823 = sbr.rel (%p821) target = $region52
      $region51: #{xlayernet_forward.1} parent=47 // pred_region
        %s824 = smul.u32 8, %s18
      $region52: #{xlayernet_forward.1} parent=47 // pred_fallthru
        _
    $region48: #{xlayernet_forward.1} parent=5 // pred_fallthru
      _
    %p825 = scmp.le.s32.totalorder 2, %s13
    // Predicated region
    $region53: #{xlayernet_forward.1} parent=5 // pred_check
      %p826 = pneg %p825
    $region54: #{xlayernet_forward.1} parent=5 // pred_check_branch
      %828 = sbr.rel (%p826) target = $region56
    $region55: #{xlayernet_forward.1} parent=5 // pred_region
      %s829 = ssub.s32 %s13, 2
      // Predicated region
      $region57: #{xlayernet_forward.1} parent=55 // pred_check
        %p830 = pneg %p194
      $region58: #{xlayernet_forward.1} parent=55 // pred_check_branch
        %832 = sbr.rel (%p830) target = $region60
      $region59: #{xlayernet_forward.1} parent=55 // pred_region
        %s833 = smul.u32 8, %s19
        %p834 = scmp.lt.s32.totalorder %s833, 31
        %s835 = scalar_select %p834, %s833, 31
        %s836 = smul.addr %s835, 8
        %s837 = scalar_lea.vmem %s7, %s836
      $region60: #{xlayernet_forward.1} parent=55 // pred_fallthru
        _
    $region56: #{xlayernet_forward.1} parent=5 // pred_fallthru
      _
  $region6: #{xlayernet_forward.1} parent=0 // loop_footer
    %s17 = sadd.s32 1, %s13
  $region7: #{xlayernet_forward.1} parent=0 // loop_footer_branch
    %12 = sbr.rel target = $region3
  $region8: #{xlayernet_forward.1} parent=0 // loop_exit
    _

</llo_original>
